<compile_context>
chip_gen: v5e
topology: v5e:2x2
jax: 0.10.0
libtpu: 0.0.40
codegen_flags: <defaults>
</compile_context>

<pallas_src>
import functools

import jax
import jax.numpy as jnp
from jax.experimental import pallas as pl
from jax.experimental.pallas import tpu as pltpu


def _feature_squeeze_kernel(x_ref, o_ref, *, scale, inv_scale):
    # elementwise: floor(x * scale) * (1/scale)   (scale is a power of two, so
    # the reciprocal multiply is exact and avoids the vector-divide sequence)
    x = x_ref[...]
    o_ref[...] = (jnp.floor(x * scale) * inv_scale).astype(o_ref.dtype)


def feature_squeezing(x, bit_depth, *, block_bytes=2 * 1024 * 1024):
    """Apply floor(x * 2**bit_depth) / 2**bit_depth elementwise.

    x: float array (any shape, e.g. NCHW). Returns array of same shape/dtype.
    block_bytes: target bytes per grid-step block (~1-4 MiB keeps the kernel
    at the HBM roofline while fitting 4x double-buffered blocks in the default
    scoped VMEM on v5e/v6e/v7x).
    """
    scale = float(2 ** bit_depth)
    inv_scale = 1.0 / scale  # exact: scale is a power of two

    orig_shape = x.shape
    orig_dtype = x.dtype
    total = x.size
    itemsize = jnp.dtype(orig_dtype).itemsize
    lanes = 128
    # dtype-native sublane multiple: 8 for f32, 16 for bf16, 32 for int8/fp8
    sub = max(8, 32 // itemsize)

    kernel = functools.partial(
        _feature_squeeze_kernel, scale=scale, inv_scale=inv_scale
    )

    # Flatten to a lane-dense 2D slab. Only pad (a full extra HBM pass) when
    # the element count does not already divide 128.
    x_flat = jnp.reshape(x, (-1,))
    pad = (-total) % lanes
    if pad:
        x_flat = jnp.pad(x_flat, (0, pad))
    rows = (total + pad) // lanes
    x2d = jnp.reshape(x_flat, (rows, lanes))

    # Large streaming block: ~block_bytes rounded down to the sublane multiple.
    tr = max(sub, (block_bytes // (lanes * itemsize)) // sub * sub)

    if rows <= tr:
        # Single block covering the whole slab (block == full array dims, so
        # the (8,128) divisibility requirement does not apply).
        block = (rows, lanes)
        grid = (1,)
    else:
        # cdiv grid: the ragged last block is clipped by Pallas; any garbage
        # read in the OOB region is never written back (elementwise op).
        block = (tr, lanes)
        grid = (pl.cdiv(rows, tr),)

    out2d = pl.pallas_call(
        kernel,
        out_shape=jax.ShapeDtypeStruct((rows, lanes), orig_dtype),
        grid_spec=pltpu.PrefetchScalarGridSpec(
            num_scalar_prefetch=0,
            grid=grid,
            in_specs=[pl.BlockSpec(block, lambda i: (i, 0))],
            out_specs=pl.BlockSpec(block, lambda i: (i, 0)),
        ),
        compiler_params=pltpu.CompilerParams(
            dimension_semantics=("parallel",),
        ),
    )(x2d)

    if pad:
        out_flat = jnp.reshape(out2d, (-1,))[:total]
    else:
        out_flat = jnp.reshape(out2d, (-1,))
    return jnp.reshape(out_flat, orig_shape)


if __name__ == "__main__":
    key = jax.random.PRNGKey(0)
    bit_depth = 4  # FeatureSqueezingLayer(bit_depth=4)

    # Main check: NCHW input consistent with an image-model forward pass.
    x = jax.random.uniform(key, (2, 4, 16, 16), dtype=jnp.float32)
    out = feature_squeezing(x, bit_depth)
    out = jax.block_until_ready(out)
    ref = jnp.floor(x * 2 ** bit_depth) / 2 ** bit_depth
    assert out.shape == x.shape and out.dtype == x.dtype
    assert jnp.allclose(out, ref), "mismatch vs reference"

    # Secondary check: awkward (non-multiple-of-128) shape with a tiny block
    # override to exercise the padded + ragged-last-block (cdiv) path.
    key2 = jax.random.PRNGKey(1)
    x2 = jax.random.uniform(key2, (3, 5, 7, 11), dtype=jnp.float32)
    out2 = feature_squeezing(x2, bit_depth, block_bytes=8 * 128 * 4)
    out2 = jax.block_until_ready(out2)
    ref2 = jnp.floor(x2 * 2 ** bit_depth) / 2 ** bit_depth
    assert out2.shape == x2.shape and out2.dtype == x2.dtype
    assert jnp.allclose(out2, ref2), "mismatch vs reference (ragged path)"

    print("KERNEL_OK")
</pallas_src>

<mosaic_0001>
module attributes {stable_mosaic.version = 11 : i64} {
  func.func @_feature_squeeze_kernel(%arg0: i32, %arg1: memref<16x128xf32, #tpu.memory_space<vmem>>, %arg2: memref<16x128xf32, #tpu.memory_space<vmem>>) attributes {dimension_semantics = [#tpu.dimension_semantics<parallel>], iteration_bounds = array<i64: 1>, scalar_prefetch = 0 : i64, scratch_operands = 0 : i64, tpu.core_type = #tpu.core_type<tc>, window_params = [{transform_indices = @transform_0, window_bounds = array<i64: 16, 128>}, {transform_indices = @transform_1, window_bounds = array<i64: 16, 128>}]} {
    %c0 = arith.constant 0 : index
    %c0_0 = arith.constant 0 : index
    %0 = vector.load %arg1[%c0, %c0_0] : memref<16x128xf32, #tpu.memory_space<vmem>>, vector<16x128xf32>
    %cst = arith.constant 1.600000e+01 : f32
    %1 = vector.broadcast %cst : f32 to vector<16x128xf32>
    %2 = arith.mulf %0, %1 : vector<16x128xf32>
    %3 = math.floor %2 : vector<16x128xf32>
    %cst_1 = arith.constant 6.250000e-02 : f32
    %4 = vector.broadcast %cst_1 : f32 to vector<16x128xf32>
    %5 = arith.mulf %3, %4 : vector<16x128xf32>
    %c0_2 = arith.constant 0 : index
    %c0_3 = arith.constant 0 : index
    %6 = vector.load %arg2[%c0_2, %c0_3] : memref<16x128xf32, #tpu.memory_space<vmem>>, vector<16x128xf32>
    tpu.vector_store %arg2[%c0_2, %c0_3], %5 {strides = array<i32>} : memref<16x128xf32, #tpu.memory_space<vmem>>, vector<16x128xf32>,
    return
  }
  func.func @transform_0(%arg0: i32) -> (i32, i32) {
    %c0_i32 = arith.constant 0 : i32
    %c0_i32_0 = arith.constant 0 : i32
    return %arg0, %c0_i32 : i32, i32
  }
  func.func @transform_1(%arg0: i32) -> (i32, i32) {
    %c0_i32 = arith.constant 0 : i32
    %c0_i32_0 = arith.constant 0 : i32
    return %arg0, %c0_i32 : i32, i32
  }
}

</mosaic_0001>

<llo_original>
// kernel: tpu_custom_call.1
$region0: #{tpu_custom_call.1}
  #allocation0 [shape = 'u32[]', space=smem, size = 0x4, offset = 0x4, fixed_abs, tag = 'smem constant byte address 0x4 - core index']
  #allocation1 [shape = 'u32[72,128]{1,0:T(1,128)}', space=vmem, size = 0x9000, scoped, tag = 'internal scratch']
  %s0 = inlined_call_operand.hbm [shape: f32[16,128], index: 0, kind: input, shape index: {}]
  %s1 = inlined_call_operand.hbm [shape: f32[16,128], index: 1, kind: output, shape index: {}]
  %s2 = sld [smem:[#allocation0]]
  $region18: #{tpu_custom_call.1} parent=0
    _
  %s4 = ssub.s32 1, %s2
  %s5 = scalar_select 0, %s4, %s2
  $region1: #{tpu_custom_call.1} parent=0
    #allocation2 [shape = 'u8[8192]{0}', space=vmem, size = 0x2000, scoped, tag = 'input window, operand 0, single buffered']
    #allocation3 [shape = 's32[1]{0}', space=sflag, size = 0x4, scoped, tag = 'scoped memory for tpu_custom_call.1']
    #allocation4 [shape = 's32[1]{0}', space=sflag, size = 0x4, scoped, tag = 'scoped memory for tpu_custom_call.1']
    #allocation5 [shape = 'u8[8192]{0}', space=vmem, size = 0x2000, scoped, tag = 'output window, operand 0, single buffered']
    %6 = vsyncpa [#allocation3], 0
    %7 = vsyncpa [#allocation4], 0
    // Predicated region
    $region2: #{tpu_custom_call.1} parent=1 // pred_check
      _
    $region3: #{tpu_custom_call.1} parent=1 // pred_check_branch
      %9 = sbr.rel (0) target = $region5
    $region4: #{tpu_custom_call.1} parent=1 // pred_region
      %11 = vsyncadd [#allocation3], 0
      %s12 = sshll.u32 %s0, 4
      %s13 = int_to_ptr.hbm [resolvable:$true] %s12
      %s14 = sshll.u32 [#allocation2], 4
      %s15 = int_to_ptr.vmem [resolvable:$true] %s14
      %20 = dma.hbm_to_vmem [thread:$0]  %s13, 256, %s15, [#allocation3], 128, 128, 8
    $region5: #{tpu_custom_call.1} parent=1 // pred_fallthru
      _
    // Predicated region
    $region6: #{tpu_custom_call.1} parent=1 // pred_check
      _
    $region7: #{tpu_custom_call.1} parent=1 // pred_check_branch
      %22 = sbr.rel (0) target = $region9
    $region8: #{tpu_custom_call.1} parent=1 // pred_region
      %24 = dma.done [#allocation3], 256
    $region9: #{tpu_custom_call.1} parent=1 // pred_fallthru
      _
    %v25 = vld [vmem:[#allocation2] sm:$0xff]
    %v26 = vld [vmem:[#allocation2 + $0x8] sm:$0xff]
    %v27 = vmul.f32 %v25, 16.0
    %v28 = vmul.f32 %v26, 16.0
    %v29 = vfloor.f32 %v27
    %v30 = vfloor.f32 %v28
    %v31 = vmul.f32 %v29, 0.0625
    %v32 = vmul.f32 %v30, 0.0625
    %33 = vst [vmem:[#allocation5] sm:$0xff] %v31
    %34 = vst [vmem:[#allocation5 + $0x8] sm:$0xff] %v32
    // Predicated region
    $region10: #{tpu_custom_call.1} parent=1 // pred_check
      _
    $region11: #{tpu_custom_call.1} parent=1 // pred_check_branch
      %36 = sbr.rel (0) target = $region13
    $region12: #{tpu_custom_call.1} parent=1 // pred_region
      %38 = vsyncadd [#allocation4], 0
      %s39 = sshll.u32 [#allocation5], 4
      %s40 = int_to_ptr.vmem [resolvable:$true] %s39
      %s41 = sshll.u32 %s1, 4
      %s42 = int_to_ptr.hbm [resolvable:$true] %s41
      %47 = dma.vmem_to_hbm [thread:$0]  %s40, 256, %s42, [#allocation4], 128, 128, 8
    $region13: #{tpu_custom_call.1} parent=1 // pred_fallthru
      _
    // Predicated region
    $region14: #{tpu_custom_call.1} parent=1 // pred_check
      _
    $region15: #{tpu_custom_call.1} parent=1 // pred_check_branch
      %49 = sbr.rel (0) target = $region17
    $region16: #{tpu_custom_call.1} parent=1 // pred_region
      %51 = dma.done [#allocation4], 256
    $region17: #{tpu_custom_call.1} parent=1 // pred_fallthru
      _
    %52 = vsyncpa [#allocation3], 1
    %53 = vsyncpa [#allocation4], 1

</llo_original>
